<compile_context>
chip_gen: v7x
topology: tpu7x:2x2x1
jax: 0.10.0
libtpu: 0.0.40
codegen_flags: <defaults>
</compile_context>

<pallas_src>
import jax
import jax.numpy as jnp
from jax import lax
from jax.experimental import pallas as pl
from jax.experimental.pallas import tpu as pltpu

MAX_BLOCK_B = 8192          # max batch rows per grid step (multiple of 128)
_CHUNK_CANDIDATES = (256, 128)  # inner strip-mine width (lanes); bounds vreg pressure


def _round_up(n, m):
    return ((n + m - 1) // m) * m


def _pick_batch_tile(batch, block_b):
    # Lane-dense tile (multiple of 128); aim for >= 2 grid steps so v7x's two
    # TensorCores both get work, capped at block_b to bound VMEM.
    half = _round_up(max(pl.cdiv(batch, 2), 1), 128)
    return max(128, min(block_b, half))


def _pick_chunk(tb):
    for c in _CHUNK_CANDIDATES:
        if tb % c == 0:
            return c
    return 128  # unreachable: tb is always a multiple of 128


def _make_valuenet_kernel(ch, nchunks):
    """Build the kernel for a given inner chunk width / chunk count (static ints)."""

    def kernel(x_ref, w1_ref, w2_ref, bv_ref, b3_ref, o_ref):
        # Resident operands (constant index_maps keep them in VMEM across grid steps).
        w1 = w1_ref[...]            # (H, S)  f32
        w2 = w2_ref[...]            # (H, H)  f32
        b1 = bv_ref[:, 0:1]         # (H, 1)  f32
        b2 = bv_ref[:, 1:2]         # (H, 1)  f32
        w3 = bv_ref[:, 2:3]         # (H, 1)  f32
        b3 = b3_ref[0, 0]           # scalar  f32 (SMEM)

        def one_chunk(off):
            xc = x_ref[pl.ds(off, ch), :]                       # (ch, S) f32
            # fc1 + relu: h1^T = relu(W1 @ xc^T + b1).  NT matmul (contract S on both
            # operands) puts the batch on the lane axis without any wrapper transpose.
            h1 = lax.dot_general(w1, xc, (((1,), (1,)), ((), ())),
                                 preferred_element_type=jnp.float32)   # (H, ch)
            h1 = jnp.maximum(h1 + b1, 0.0)
            # fc2 + relu: (H, H) @ (H, ch) -> (H, ch)
            h2 = jnp.dot(w2, h1, preferred_element_type=jnp.float32)
            h2 = jnp.maximum(h2 + b2, 0.0)
            # fc3: contract H with a VPU multiply + cross-sublane reduce; store a
            # lane-dense (1, ch) slice of the output row.
            o_ref[:, pl.ds(off, ch)] = (
                jnp.sum(h2 * w3, axis=0, keepdims=True) + b3)

        if nchunks == 1:
            one_chunk(0)
        else:
            # Strip-mine over lane chunks with a real fori_loop so intermediates'
            # live ranges are bounded (kept in vregs) while the outer tile stays big.
            def body(c, carry):
                one_chunk(pl.multiple_of(c * ch, ch))
                return carry

            lax.fori_loop(0, nchunks, body, 0)

    return kernel


def value_net_forward(x, w1, b1, w2, b2, w3, b3, *, block_b=MAX_BLOCK_B):
    """Pallas forward pass of ValueNet.

    x : [B, S] float                          (same layout as the PyTorch input)
    w1: [H, S]   b1: [H]                      (fc1.weight / fc1.bias)
    w2: [H, H]   b2: [H]                      (fc2.weight / fc2.bias)
    w3: [1, H]   b3: [1]                      (fc3.weight / fc3.bias)
    returns [B, 1] float32
    """
    B, S = x.shape
    H = w1.shape[0]

    tb = _pick_batch_tile(B, block_b)
    ch = _pick_chunk(tb)
    b_pad = _round_up(B, tb)
    grid = (b_pad // tb,)

    xf = x.astype(jnp.float32)
    if b_pad != B:
        # Only the ragged case copies; typical power-of-two PPO batches hit the
        # copy-free path (no transpose/cast staging in any case).
        xf = jnp.pad(xf, ((0, b_pad - B), (0, 0)))

    w1f = jnp.asarray(w1, jnp.float32)
    w2f = jnp.asarray(w2, jnp.float32)
    # Pack the three H-vector params into a single resident (H, 3) operand.
    bv = jnp.stack([jnp.reshape(b1, (H,)).astype(jnp.float32),
                    jnp.reshape(b2, (H,)).astype(jnp.float32),
                    jnp.reshape(w3, (H,)).astype(jnp.float32)], axis=1)
    b3s = jnp.reshape(jnp.asarray(b3, jnp.float32), (1, 1))

    flops = 2 * B * (H * S + H * H + H)
    bytes_accessed = (B * S + B) * 4 + (H * S + H * H + 3 * H + 1) * 4

    resident = lambda i: (0, 0)   # weights/biases stay resident across grid steps

    out = pl.pallas_call(
        _make_valuenet_kernel(ch, tb // ch),
        out_shape=jax.ShapeDtypeStruct((1, b_pad), jnp.float32),
        grid=grid,
        in_specs=[
            pl.BlockSpec((tb, S), lambda i: (i, 0)),        # x batch tile (row-major)
            pl.BlockSpec((H, S), resident),                 # W1
            pl.BlockSpec((H, H), resident),                 # W2
            pl.BlockSpec((H, 3), resident),                 # [b1 | b2 | w3]
            pl.BlockSpec(memory_space=pltpu.MemorySpace.SMEM),  # b3 scalar
        ],
        out_specs=pl.BlockSpec((1, tb), lambda i: (0, i)),  # lane-dense output row
        compiler_params=pltpu.CompilerParams(
            dimension_semantics=("parallel",),              # 2 TCs on v7x
            vmem_limit_bytes=32 * 1024 * 1024),
        cost_estimate=pl.CostEstimate(flops=flops, transcendentals=0,
                                      bytes_accessed=bytes_accessed),
    )(xf, w1f, w2f, bv, b3s)

    # (1, B) -> (B, 1) is a pure reorder-free reshape of the valid slice.
    return out[0, :B].reshape(B, 1)


def init_params(key, state_dim, hidden_dim):
    """U(-1/sqrt(fan_in), 1/sqrt(fan_in)) init in the PyTorch nn.Linear layout."""
    ks = jax.random.split(key, 6)

    def uni(k, shape, fan_in):
        bound = 1.0 / jnp.sqrt(jnp.float32(fan_in))
        return jax.random.uniform(k, shape, jnp.float32, -bound, bound)

    w1 = uni(ks[0], (hidden_dim, state_dim), state_dim)
    b1 = uni(ks[1], (hidden_dim,), state_dim)
    w2 = uni(ks[2], (hidden_dim, hidden_dim), hidden_dim)
    b2 = uni(ks[3], (hidden_dim,), hidden_dim)
    w3 = uni(ks[4], (1, hidden_dim), hidden_dim)
    b3 = uni(ks[5], (1,), hidden_dim)
    return w1, b1, w2, b2, w3, b3


def reference_forward(x, w1, b1, w2, b2, w3, b3):
    """Pure-JAX f32 reference mirroring the PyTorch module."""
    hp = lax.Precision.HIGHEST
    h1 = jnp.maximum(jnp.dot(x, w1.T, precision=hp) + b1, 0.0)
    h2 = jnp.maximum(jnp.dot(h1, w2.T, precision=hp) + b2, 0.0)
    return jnp.dot(h2, w3.T, precision=hp) + b3


if __name__ == "__main__":
    state_dim, hidden_dim, batch = 12, 32, 8

    key = jax.random.PRNGKey(0)
    kx, kp = jax.random.split(key)
    x = jax.random.normal(kx, (batch, state_dim), dtype=jnp.float32)
    params = init_params(kp, state_dim, hidden_dim)

    out = jax.block_until_ready(value_net_forward(x, *params))
    ref = reference_forward(x, *params)
    assert out.shape == (batch, 1)
    assert jnp.allclose(out, ref, atol=1e-2, rtol=1e-2), "Pallas output mismatch vs reference"

    # Exercise the tiled paths: >= 2 grid steps, ragged batch padding, and the
    # strip-mined inner loop (b=2055 -> tile 1152, 9 chunks of 128).
    for b in (300, 2055):
        xb = jax.random.normal(jax.random.PRNGKey(1), (b, state_dim), dtype=jnp.float32)
        ob = jax.block_until_ready(value_net_forward(xb, *params))
        rb = reference_forward(xb, *params)
        assert ob.shape == (b, 1)
        assert jnp.allclose(ob, rb, atol=1e-2, rtol=1e-2), "Pallas tiled-path mismatch vs reference"

    print("KERNEL_OK")
</pallas_src>

<mosaic_0001>
module attributes {stable_mosaic.version = 11 : i64} {
  func.func @kernel(%arg0: i32, %arg1: memref<128x12xf32, #tpu.memory_space<vmem>>, %arg2: memref<32x12xf32, #tpu.memory_space<vmem>>, %arg3: memref<32x32xf32, #tpu.memory_space<vmem>>, %arg4: memref<32x3xf32, #tpu.memory_space<vmem>>, %arg5: memref<1x1xf32, #tpu.memory_space<smem>>, %arg6: memref<1x128xf32, #tpu.memory_space<vmem>>) attributes {dimension_semantics = [#tpu.dimension_semantics<parallel>], iteration_bounds = array<i64: 1>, scalar_prefetch = 0 : i64, scratch_operands = 0 : i64, tpu.core_type = #tpu.core_type<tc>, window_params = [{transform_indices = @transform_0, window_bounds = array<i64: 128, 12>}, {pipeline_mode = #tpu.pipeline_mode<synchronous>, transform_indices = @transform_1, window_bounds = array<i64: 32, 12>}, {pipeline_mode = #tpu.pipeline_mode<synchronous>, transform_indices = @transform_2, window_bounds = array<i64: 32, 32>}, {pipeline_mode = #tpu.pipeline_mode<synchronous>, transform_indices = @transform_3, window_bounds = array<i64: 32, 3>}, {transform_indices = @transform_4, window_bounds = array<i64: 1, 1>}, {transform_indices = @transform_5, window_bounds = array<i64: 1, 128>}]} {
    %c0 = arith.constant 0 : index
    %c0_0 = arith.constant 0 : index
    %0 = vector.load %arg2[%c0, %c0_0] : memref<32x12xf32, #tpu.memory_space<vmem>>, vector<32x12xf32>
    %c0_1 = arith.constant 0 : index
    %c0_2 = arith.constant 0 : index
    %1 = vector.load %arg3[%c0_1, %c0_2] : memref<32x32xf32, #tpu.memory_space<vmem>>, vector<32x32xf32>
    %c0_3 = arith.constant 0 : index
    %c0_4 = arith.constant 0 : index
    %2 = vector.load %arg4[%c0_3, %c0_4] : memref<32x3xf32, #tpu.memory_space<vmem>>, vector<32x1xf32>
    %c0_5 = arith.constant 0 : index
    %c1 = arith.constant 1 : index
    %3 = vector.load %arg4[%c0_5, %c1] : memref<32x3xf32, #tpu.memory_space<vmem>>, vector<32x1xf32>
    %c0_6 = arith.constant 0 : index
    %c2 = arith.constant 2 : index
    %4 = vector.load %arg4[%c0_6, %c2] : memref<32x3xf32, #tpu.memory_space<vmem>>, vector<32x1xf32>
    %c0_7 = arith.constant 0 : index
    %c0_8 = arith.constant 0 : index
    %5 = memref.load %arg5[%c0_7, %c0_8] : memref<1x1xf32, #tpu.memory_space<smem>>
    %c0_9 = arith.constant 0 : index
    %c0_10 = arith.constant 0 : index
    %6 = vector.load %arg1[%c0_9, %c0_10] : memref<128x12xf32, #tpu.memory_space<vmem>>, vector<128x12xf32>
    %cst = arith.constant dense<0.000000e+00> : vector<32x128xf32>
    %7 = tpu.matmul %0, %6, %cst {dimension_numbers = #tpu.dot_dimension_numbers<[1], [1], [0], [0], [0, 0, 1, 0], [], []>} : vector<32x12xf32>, vector<128x12xf32>, vector<32x128xf32> -> vector<32x128xf32>
    %8 = vector.broadcast %2 : vector<32x1xf32> to vector<32x128xf32>
    %9 = arith.addf %7, %8 : vector<32x128xf32>
    %cst_11 = arith.constant 0.000000e+00 : f32
    %10 = vector.broadcast %cst_11 : f32 to vector<32x128xf32>
    %11 = arith.maximumf %9, %10 : vector<32x128xf32>
    %cst_12 = arith.constant dense<0.000000e+00> : vector<32x128xf32>
    %12 = tpu.matmul %1, %11, %cst_12 {dimension_numbers = #tpu.dot_dimension_numbers<[1], [0], [0], [1], [0, 0, 1, 1], [], []>} : vector<32x32xf32>, vector<32x128xf32>, vector<32x128xf32> -> vector<32x128xf32>
    %13 = vector.broadcast %3 : vector<32x1xf32> to vector<32x128xf32>
    %14 = arith.addf %12, %13 : vector<32x128xf32>
    %cst_13 = arith.constant 0.000000e+00 : f32
    %15 = vector.broadcast %cst_13 : f32 to vector<32x128xf32>
    %16 = arith.maximumf %14, %15 : vector<32x128xf32>
    %17 = vector.broadcast %4 : vector<32x1xf32> to vector<32x128xf32>
    %18 = arith.mulf %16, %17 : vector<32x128xf32>
    %cst_14 = arith.constant dense<0.000000e+00> : vector<128xf32>
    %19 = vector.multi_reduction <add>, %18, %cst_14 [0] : vector<32x128xf32> to vector<128xf32>
    %20 = vector.shape_cast %19 : vector<128xf32> to vector<1x128xf32>
    %21 = vector.broadcast %5 : f32 to vector<1x128xf32>
    %22 = arith.addf %20, %21 : vector<1x128xf32>
    %c0_15 = arith.constant 0 : index
    %c0_16 = arith.constant 0 : index
    %23 = vector.load %arg6[%c0_15, %c0_16] : memref<1x128xf32, #tpu.memory_space<vmem>>, vector<1x128xf32>
    tpu.vector_store %arg6[%c0_15, %c0_16], %22 {strides = array<i32>} : memref<1x128xf32, #tpu.memory_space<vmem>>, vector<1x128xf32>,
    return
  }
  func.func @transform_0(%arg0: i32) -> (i32, i32) {
    %c0_i32 = arith.constant 0 : i32
    %c0_i32_0 = arith.constant 0 : i32
    return %arg0, %c0_i32 : i32, i32
  }
  func.func @transform_1(%arg0: i32) -> (i32, i32) {
    %c0_i32 = arith.constant 0 : i32
    %c0_i32_0 = arith.constant 0 : i32
    %c0_i32_1 = arith.constant 0 : i32
    return %c0_i32, %c0_i32_0 : i32, i32
  }
  func.func @transform_2(%arg0: i32) -> (i32, i32) {
    %c0_i32 = arith.constant 0 : i32
    %c0_i32_0 = arith.constant 0 : i32
    %c0_i32_1 = arith.constant 0 : i32
    return %c0_i32, %c0_i32_0 : i32, i32
  }
  func.func @transform_3(%arg0: i32) -> (i32, i32) {
    %c0_i32 = arith.constant 0 : i32
    %c0_i32_0 = arith.constant 0 : i32
    %c0_i32_1 = arith.constant 0 : i32
    return %c0_i32, %c0_i32_0 : i32, i32
  }
  func.func @transform_4(%arg0: i32) -> (i32, i32) {
    %c0_i32 = arith.constant 0 : i32
    %c0_i32_0 = arith.constant 0 : i32
    %c0_i32_1 = arith.constant 0 : i32
    return %c0_i32, %c0_i32_0 : i32, i32
  }
  func.func @transform_5(%arg0: i32) -> (i32, i32) {
    %c0_i32 = arith.constant 0 : i32
    %c0_i32_0 = arith.constant 0 : i32
    return %c0_i32, %arg0 : i32, i32
  }
}

</mosaic_0001>

<llo_original>
// kernel: tpu_custom_call.1
$region0: #{tpu_custom_call.1}
  #allocation0 [shape = 'u32[]', space=smem, size = 0x4, offset = 0x4, fixed_abs, tag = 'smem constant byte address 0x4 - core index']
  #allocation1 [shape = 'u32[144,128]{1,0:T(1,128)}', space=vmem, size = 0x12000, scoped, tag = 'internal scratch']
  #allocation2 [shape = 'f32[1,1]{1,0:T(1,128)S(6)}', space=smem, size = 0x200, scoped, tag = 'scoped memory for tpu_custom_call.1']
  %s0 = inlined_call_operand.vmem [shape: f32[128,12], index: 0, kind: input, shape index: {}]
  %s1 = inlined_call_operand.vmem [shape: f32[32,12], index: 1, kind: input, shape index: {}]
  %s2 = inlined_call_operand.vmem [shape: f32[32,32], index: 2, kind: input, shape index: {}]
  %s3 = inlined_call_operand.vmem [shape: f32[32,3], index: 3, kind: input, shape index: {}]
  %s4 = inlined_call_operand.<no memory space> [shape: f32[1,1], index: 4, kind: input, shape index: {}]
  %s5 = inlined_call_operand.hbm [shape: f32[1,128], index: 5, kind: output, shape index: {}]
  %s6 = sld [smem:[#allocation0]]
  $region30: #{tpu_custom_call.1} parent=0
    _
  %s8 = ssub.s32 1, %s6
  %s9 = scalar_select 0, %s8, %s6
  %10 = sst [smem:[#allocation2]] %s4
  $region1: #{tpu_custom_call.1} parent=0
    #allocation3 [shape = 'u8[512]{0}', space=vmem, size = 0x400, scoped, tag = 'output window, operand 0, single buffered']
    #allocation4 [shape = 's32[1]{0}', space=sflag, size = 0x4, scoped, tag = 'scoped memory for tpu_custom_call.1']
    %11 = vsyncpa [#allocation4], 0
    // Predicated region
    $region2: #{tpu_custom_call.1} parent=1 // pred_check
      _
    $region3: #{tpu_custom_call.1} parent=1 // pred_check_branch
      %13 = sbr.rel (0) target = $region5
    $region4: #{tpu_custom_call.1} parent=1 // pred_region
      _
    $region5: #{tpu_custom_call.1} parent=1 // pred_fallthru
      _
    // Predicated region
    $region6: #{tpu_custom_call.1} parent=1 // pred_check
      _
    $region7: #{tpu_custom_call.1} parent=1 // pred_check_branch
      %15 = sbr.rel (0) target = $region9
    $region8: #{tpu_custom_call.1} parent=1 // pred_region
      _
    $region9: #{tpu_custom_call.1} parent=1 // pred_fallthru
      _
    // Predicated region
    $region10: #{tpu_custom_call.1} parent=1 // pred_check
      _
    $region11: #{tpu_custom_call.1} parent=1 // pred_check_branch
      %17 = sbr.rel (0) target = $region13
    $region12: #{tpu_custom_call.1} parent=1 // pred_region
      _
    $region13: #{tpu_custom_call.1} parent=1 // pred_fallthru
      _
    // Predicated region
    $region14: #{tpu_custom_call.1} parent=1 // pred_check
      _
    $region15: #{tpu_custom_call.1} parent=1 // pred_check_branch
      %19 = sbr.rel (0) target = $region17
    $region16: #{tpu_custom_call.1} parent=1 // pred_region
      _
    $region17: #{tpu_custom_call.1} parent=1 // pred_fallthru
      _
    // Predicated region
    $region18: #{tpu_custom_call.1} parent=1 // pred_check
      _
    $region19: #{tpu_custom_call.1} parent=1 // pred_check_branch
      %21 = sbr.rel (0) target = $region21
    $region20: #{tpu_custom_call.1} parent=1 // pred_region
      _
    $region21: #{tpu_custom_call.1} parent=1 // pred_fallthru
      _
    %v22 = vld [vmem:[%s1] sm:$0xff]
    %v23 = vld [vmem:[%s1 + $0x8] sm:$0xff]
    %v24 = vld [vmem:[%s1 + $0x10] sm:$0xff]
    %v25 = vld [vmem:[%s1 + $0x18] sm:$0xff]
    %v26 = vld [vmem:[%s2] sm:$0xff]
    %v27 = vld [vmem:[%s2 + $0x8] sm:$0xff]
    %v28 = vld [vmem:[%s2 + $0x10] sm:$0xff]
    %v29 = vld [vmem:[%s2 + $0x18] sm:$0xff]
    %v30 = vld [vmem:[%s3] sm:$0xff]
    %v31 = vld [vmem:[%s3 + $0x8] sm:$0xff]
    %v32 = vld [vmem:[%s3 + $0x10] sm:$0xff]
    %v33 = vld [vmem:[%s3 + $0x18] sm:$0xff]
    %s34 = sld [smem:[#allocation2]]
    %v35 = vld [vmem:[%s0] sm:$0xff]
    %v36 = vld [vmem:[%s0 + $0x8] sm:$0xff]
    %v37 = vld [vmem:[%s0 + $0x10] sm:$0xff]
    %v38 = vld [vmem:[%s0 + $0x18] sm:$0xff]
    %v39 = vld [vmem:[%s0 + $0x20] sm:$0xff]
    %v40 = vld [vmem:[%s0 + $0x28] sm:$0xff]
    %v41 = vld [vmem:[%s0 + $0x30] sm:$0xff]
    %v42 = vld [vmem:[%s0 + $0x38] sm:$0xff]
    %v43 = vld [vmem:[%s0 + $0x40] sm:$0xff]
    %v44 = vld [vmem:[%s0 + $0x48] sm:$0xff]
    %v45 = vld [vmem:[%s0 + $0x50] sm:$0xff]
    %v46 = vld [vmem:[%s0 + $0x58] sm:$0xff]
    %v47 = vld [vmem:[%s0 + $0x60] sm:$0xff]
    %v48 = vld [vmem:[%s0 + $0x68] sm:$0xff]
    %v49 = vld [vmem:[%s0 + $0x70] sm:$0xff]
    %v50 = vld [vmem:[%s0 + $0x78] sm:$0xff]
    %52 = vset.pattern.permute.xlu0 0
    %53 = vperm.xlu0 %52, %v30
    %v54 = vpop.permute.xlu0 %53
    %57 = vset.pattern.permute.xlu0 0
    %58 = vperm.xlu0 %57, %v31
    %v59 = vpop.permute.xlu0 %58
    %62 = vset.pattern.permute.xlu0 0
    %63 = vperm.xlu0 %62, %v32
    %v64 = vpop.permute.xlu0 %63
    %67 = vset.pattern.permute.xlu0 0
    %68 = vperm.xlu0 %67, %v33
    %v69 = vpop.permute.xlu0 %68
    %vm71 = vcmask 97280
    %v73 = vsel %vm71, %v22, 0
    %v76 = vsel %vm71, %v23, 0
    %v79 = vsel %vm71, %v24, 0
    %v82 = vsel %vm71, %v25, 0
    %v85 = vsel %vm71, %v35, 0
    %v88 = vsel %vm71, %v36, 0
    %v91 = vsel %vm71, %v37, 0
    %v94 = vsel %vm71, %v38, 0
    %v97 = vsel %vm71, %v39, 0
    %v100 = vsel %vm71, %v40, 0
    %v103 = vsel %vm71, %v41, 0
    %v106 = vsel %vm71, %v42, 0
    %v109 = vsel %vm71, %v43, 0
    %v112 = vsel %vm71, %v44, 0
    %v115 = vsel %vm71, %v45, 0
    %v118 = vsel %vm71, %v46, 0
    %v121 = vsel %vm71, %v47, 0
    %v124 = vsel %vm71, %v48, 0
    %v127 = vsel %vm71, %v49, 0
    %v130 = vsel %vm71, %v50, 0
    %132 = vmatprep.subr.mxu0 0.0
    %133 = vmatpush1.xpose.msra.mxu0 %v85
    %134 = vmatprep.subr.mxu0 0.0
    %135 = vmatpush1.xpose.msra.mxu0 %v88
    %136 = vmatprep.subr.mxu0 0.0
    %137 = vmatpush1.xpose.msra.mxu0 %v91
    %138 = vmatprep.subr.mxu0 0.0
    %139 = vmatpush1.xpose.msra.mxu0 %v94
    %140 = vmatprep.subr.mxu0 0.0
    %141 = vmatpush1.xpose.msra.mxu0 %v97
    %142 = vmatprep.subr.mxu0 0.0
    %143 = vmatpush1.xpose.msra.mxu0 %v100
    %144 = vmatprep.subr.mxu0 0.0
    %145 = vmatpush1.xpose.msra.mxu0 %v103
    %146 = vmatprep.subr.mxu0 0.0
    %147 = vmatpush1.xpose.msra.mxu0 %v106
    %148 = vmatprep.subr.mxu0 0.0
    %149 = vmatpush1.xpose.msra.mxu0 %v109
    %150 = vmatprep.subr.mxu0 0.0
    %151 = vmatpush1.xpose.msra.mxu0 %v112
    %152 = vmatprep.subr.mxu0 0.0
    %153 = vmatpush1.xpose.msra.mxu0 %v115
    %154 = vmatprep.subr.mxu0 0.0
    %155 = vmatpush1.xpose.msra.mxu0 %v118
    %156 = vmatprep.subr.mxu0 0.0
    %157 = vmatpush1.xpose.msra.mxu0 %v121
    %158 = vmatprep.subr.mxu0 0.0
    %159 = vmatpush1.xpose.msra.mxu0 %v124
    %160 = vmatprep.subr.mxu0 0.0
    %161 = vmatpush1.xpose.msra.mxu0 %v127
    %162 = vmatprep.subr.mxu0 0.0
    %163 = vmatpush1.xpose.msra.mxu0 %v130
    %164 = vmatprep.subr.mxu0 0.0
    %165 = vmatpush1.xpose.msra.mxu0 0.0
    %166 = vmatprep.subr.mxu0 0.0
    %167 = vmatpush1.xpose.msra.mxu0 0.0
    %168 = vmatprep.subr.mxu0 0.0
    %169 = vmatpush1.xpose.msra.mxu0 0.0
    %170 = vmatprep.subr.mxu0 0.0
    %171 = vmatpush1.xpose.msra.mxu0 0.0
    %172 = vmatprep.subr.mxu0 0.0
    %173 = vmatpush1.xpose.msra.mxu0 0.0
    %174 = vmatprep.subr.mxu0 0.0
    %175 = vmatpush1.xpose.msra.mxu0 0.0
    %176 = vmatprep.subr.mxu0 0.0
    %177 = vmatpush1.xpose.msra.mxu0 0.0
    %178 = vmatprep.subr.mxu0 0.0
    %179 = vmatpush1.xpose.msra.mxu0 0.0
    %180 = vmatprep.subr.mxu0 0.0
    %181 = vmatpush1.xpose.msra.mxu0 0.0
    %182 = vmatprep.subr.mxu0 0.0
    %183 = vmatpush1.xpose.msra.mxu0 0.0
    %184 = vmatprep.subr.mxu0 0.0
    %185 = vmatpush1.xpose.msra.mxu0 0.0
    %186 = vmatprep.subr.mxu0 0.0
    %187 = vmatpush1.xpose.msra.mxu0 0.0
    %188 = vmatprep.subr.mxu0 0.0
    %189 = vmatpush1.xpose.msra.mxu0 0.0
    %190 = vmatprep.subr.mxu0 0.0
    %191 = vmatpush1.xpose.msra.mxu0 0.0
    %192 = vmatprep.subr.mxu0 0.0
    %193 = vmatpush1.xpose.msra.mxu0 0.0
    %194 = vmatprep.subr.mxu0 0.0
    %195 = vmatpush1.xpose.msra.mxu0 0.0
    %196 = vmatprep.mubr.f32.mxu0 0.0
    %197 = vmatmul.mubr.f32.gmra.mrb[0].mxu0 %v73
    %v198 = vpop.f32.mrb[0].mxu0
    %v199 = vadd.f32 %v54, %v198
    %v200 = vpop.f32.mrb[0].mxu0
    %201 = vmatprep.mubr.f32.mxu0 0.0
    %202 = vmatmul.mubr.f32.gmra.mrb[0].mxu0 %v76
    %v203 = vpop.f32.mrb[0].mxu0
    %v204 = vadd.f32 %v59, %v203
    %v205 = vpop.f32.mrb[0].mxu0
    %206 = vmatprep.mubr.f32.mxu0 0.0
    %207 = vmatmul.mubr.f32.gmra.mrb[0].mxu0 %v79
    %v208 = vpop.f32.mrb[0].mxu0
    %v209 = vadd.f32 %v64, %v208
    %v210 = vpop.f32.mrb[0].mxu0
    %211 = vmatprep.mubr.f32.mxu0 0.0
    %212 = vmatmul.mubr.f32.gmra.mrb[0].mxu0 %v82
    %v213 = vpop.f32.mrb[0].mxu0
    %v214 = vadd.f32 %v69, %v213
    %v215 = vpop.f32.mrb[0].mxu0
    %216 = vdwg.mxu0
    %v217 = vmax.f32 %v199, 0.0
    %v218 = vmax.f32 %v204, 0.0
    %v219 = vmax.f32 %v209, 0.0
    %v220 = vmax.f32 %v214, 0.0
    %221 = vset.pattern.permute.xlu0 1
    %222 = vperm.xlu0 %221, %v30
    %v223 = vpop.permute.xlu0 %222
    %225 = vset.pattern.permute.xlu0 1
    %226 = vperm.xlu0 %225, %v31
    %v227 = vpop.permute.xlu0 %226
    %229 = vset.pattern.permute.xlu0 1
    %230 = vperm.xlu0 %229, %v32
    %v231 = vpop.permute.xlu0 %230
    %233 = vset.pattern.permute.xlu0 1
    %234 = vperm.xlu0 %233, %v33
    %v235 = vpop.permute.xlu0 %234
    %vm237 = vcmask 261120
    %v239 = vsel %vm237, %v26, 0
    %v242 = vsel %vm237, %v27, 0
    %v245 = vsel %vm237, %v28, 0
    %v248 = vsel %vm237, %v29, 0
    %250 = vmatprep.subr.mxu0 0.0
    %251 = vmatpush1.msra.mxu0 %v217
    %252 = vmatprep.subr.mxu0 0.0
    %253 = vmatpush1.msra.mxu0 %v218
    %254 = vmatprep.subr.mxu0 0.0
    %255 = vmatpush1.msra.mxu0 %v219
    %256 = vmatprep.subr.mxu0 0.0
    %257 = vmatpush1.msra.mxu0 %v220
    %258 = vmatprep.subr.mxu0 0.0
    %259 = vmatpush1.msra.mxu0 0.0
    %260 = vmatprep.subr.mxu0 0.0
    %261 = vmatpush1.msra.mxu0 0.0
    %262 = vmatprep.subr.mxu0 0.0
    %263 = vmatpush1.msra.mxu0 0.0
    %264 = vmatprep.subr.mxu0 0.0
    %265 = vmatpush1.msra.mxu0 0.0
    %266 = vmatprep.subr.mxu0 0.0
    %267 = vmatpush1.msra.mxu0 0.0
    %268 = vmatprep.subr.mxu0 0.0
    %269 = vmatpush1.msra.mxu0 0.0
    %270 = vmatprep.subr.mxu0 0.0
    %271 = vmatpush1.msra.mxu0 0.0
    %272 = vmatprep.subr.mxu0 0.0
    %273 = vmatpush1.msra.mxu0 0.0
    %274 = vmatprep.subr.mxu0 0.0
    %275 = vmatpush1.msra.mxu0 0.0
    %276 = vmatprep.subr.mxu0 0.0
    %277 = vmatpush1.msra.mxu0 0.0
    %278 = vmatprep.subr.mxu0 0.0
    %279 = vmatpush1.msra.mxu0 0.0
    %280 = vmatprep.subr.mxu0 0.0
    %281 = vmatpush1.msra.mxu0 0.0
    %282 = vmatprep.subr.mxu0 0.0
    %283 = vmatpush1.msra.mxu0 0.0
    %284 = vmatprep.subr.mxu0 0.0
    %285 = vmatpush1.msra.mxu0 0.0
    %286 = vmatprep.subr.mxu0 0.0
    %287 = vmatpush1.msra.mxu0 0.0
    %288 = vmatprep.subr.mxu0 0.0
    %289 = vmatpush1.msra.mxu0 0.0
    %290 = vmatprep.subr.mxu0 0.0
    %291 = vmatpush1.msra.mxu0 0.0
    %292 = vmatprep.subr.mxu0 0.0
    %293 = vmatpush1.msra.mxu0 0.0
    %294 = vmatprep.subr.mxu0 0.0
    %295 = vmatpush1.msra.mxu0 0.0
    %296 = vmatprep.subr.mxu0 0.0
    %297 = vmatpush1.msra.mxu0 0.0
    %298 = vmatprep.subr.mxu0 0.0
    %299 = vmatpush1.msra.mxu0 0.0
    %300 = vmatprep.subr.mxu0 0.0
    %301 = vmatpush1.msra.mxu0 0.0
    %302 = vmatprep.subr.mxu0 0.0
    %303 = vmatpush1.msra.mxu0 0.0
    %304 = vmatprep.subr.mxu0 0.0
    %305 = vmatpush1.msra.mxu0 0.0
    %306 = vmatprep.subr.mxu0 0.0
    %307 = vmatpush1.msra.mxu0 0.0
    %308 = vmatprep.subr.mxu0 0.0
    %309 = vmatpush1.msra.mxu0 0.0
    %310 = vmatprep.subr.mxu0 0.0
    %311 = vmatpush1.msra.mxu0 0.0
    %312 = vmatprep.subr.mxu0 0.0
    %313 = vmatpush1.msra.mxu0 0.0
    %314 = vmatprep.mubr.f32.mxu0 0.0
    %315 = vmatmul.mubr.f32.gmra.mrb[0].mxu0 %v239
    %v316 = vpop.f32.mrb[0].mxu0
    %v317 = vadd.f32 %v223, %v316
    %v318 = vpop.f32.mrb[0].mxu0
    %319 = vmatprep.mubr.f32.mxu0 0.0
    %320 = vmatmul.mubr.f32.gmra.mrb[0].mxu0 %v242
    %v321 = vpop.f32.mrb[0].mxu0
    %v322 = vadd.f32 %v227, %v321
    %v323 = vpop.f32.mrb[0].mxu0
    %324 = vmatprep.mubr.f32.mxu0 0.0
    %325 = vmatmul.mubr.f32.gmra.mrb[0].mxu0 %v245
    %v326 = vpop.f32.mrb[0].mxu0
    %v327 = vadd.f32 %v231, %v326
    %v328 = vpop.f32.mrb[0].mxu0
    %329 = vmatprep.mubr.f32.mxu0 0.0
    %330 = vmatmul.mubr.f32.gmra.mrb[0].mxu0 %v248
    %v331 = vpop.f32.mrb[0].mxu0
    %v332 = vadd.f32 %v235, %v331
    %v333 = vpop.f32.mrb[0].mxu0
    %334 = vdwg.mxu0
    %v335 = vmax.f32 %v317, 0.0
    %v336 = vmax.f32 %v322, 0.0
    %v337 = vmax.f32 %v327, 0.0
    %v338 = vmax.f32 %v332, 0.0
    %339 = vset.pattern.permute.xlu0 2
    %340 = vperm.xlu0 %339, %v30
    %v341 = vpop.permute.xlu0 %340
    %343 = vset.pattern.permute.xlu0 2
    %344 = vperm.xlu0 %343, %v31
    %v345 = vpop.permute.xlu0 %344
    %347 = vset.pattern.permute.xlu0 2
    %348 = vperm.xlu0 %347, %v32
    %v349 = vpop.permute.xlu0 %348
    %351 = vset.pattern.permute.xlu0 2
    %352 = vperm.xlu0 %351, %v33
    %v353 = vpop.permute.xlu0 %352
    %v355 = vmul.f32 %v335, %v341
    %v356 = vmul.f32 %v336, %v345
    %v357 = vmul.f32 %v337, %v349
    %v358 = vmul.f32 %v338, %v353
    %v359 = vadd.f32 %v355, %v356
    %v360 = vadd.f32 %v359, %v357
    %v361 = vadd.f32 %v360, %v358
    %v362 = vrot.slane %v361, 4
    %v363 = vadd.f32 %v361, %v362
    %v364 = vrot.slane %v363, 2
    %v365 = vadd.f32 %v363, %v364
    %v366 = vrot.slane %v365, 1
    %v367 = vadd.f32 %v365, %v366
    %v368 = vstv %s34
    %v369 = vadd.f32 %v367, %v368
    %370 = vst [vmem:[#allocation3] sm:$0x1] %v369
    // Predicated region
    $region22: #{tpu_custom_call.1} parent=1 // pred_check
      _
    $region23: #{tpu_custom_call.1} parent=1 // pred_check_branch
      %372 = sbr.rel (0) target = $region25
    $region24: #{tpu_custom_call.1} parent=1 // pred_region
      %s374 = ssub.s32 16, 16
      %375 = vsyncadd [#allocation4], %s374
      %s377 = sshll.u32 [#allocation3], 4
      %s378 = int_to_ptr.vmem [resolvable:$true] %s377
      %380 = dma.vmem_to_hbm [thread:$0]  %s378, 16, %s5, [#allocation4]
    $region25: #{tpu_custom_call.1} parent=1 // pred_fallthru
      _
    // Predicated region
    $region26: #{tpu_custom_call.1} parent=1 // pred_check
      _
    $region27: #{tpu_custom_call.1} parent=1 // pred_check_branch
      %382 = sbr.rel (0) target = $region29
    $region28: #{tpu_custom_call.1} parent=1 // pred_region
      %383 = dma.done [#allocation4], 16
    $region29: #{tpu_custom_call.1} parent=1 // pred_fallthru
      _
    %384 = vsyncpa [#allocation4], 1

</llo_original>
